<compile_context>
chip_gen: v7x
topology: tpu7x:2x2x1
jax: 0.10.0
libtpu: 0.0.40
codegen_flags: <defaults>
</compile_context>

<pallas_src>
import math
from functools import partial

import jax
import jax.numpy as jnp
from jax.experimental import pallas as pl
from jax.experimental.pallas import tpu as pltpu


def _bessel_kernel(dist_ref, freq_ref, out_ref, *, inv_cutoff, p, num_radial,
                   use_chebyshev):
    # dist_ref: (1, TE) f32, freq_ref: (R, 1) f32, out_ref: (R, TE)
    a = -(p + 1) * (p + 2) / 2.0
    b = float(p * (p + 2))
    c = -p * (p + 1) / 2.0

    x = dist_ref[...] * inv_cutoff                    # (1, TE), mul not div

    # Envelope evaluated once per edge row (one vreg-row of work).
    # Exact 1/x (NOT approx reciprocal) to preserve 1e-5 accuracy near small x.
    x_pow_p0 = x ** (p - 1)                           # integer pow -> repeated mul
    x_pow_p1 = x_pow_p0 * x
    x_pow_p2 = x_pow_p1 * x
    env = 1.0 / x + a * x_pow_p0 + b * x_pow_p1 + c * x_pow_p2
    env = jnp.where(x < 1.0, env, 0.0)                # (1, TE)

    if use_chebyshev:
        # Valid only while freq[r] == (r+1) * freq[0] (exact at init: n*pi).
        # sin((n+1)θ) = 2cosθ·sin(nθ) − sin((n−1)θ): 2 transcendentals per edge.
        base = freq_ref[pl.ds(0, 1), :]               # (1, 1)
        theta = base * x                              # (1, TE)
        s_prev = jnp.zeros_like(x)                    # sin(0·θ)
        s_cur = jnp.sin(theta)                        # sin(1·θ)
        two_c = 2.0 * jnp.cos(theta)
        out_ref[pl.ds(0, 1), :] = (env * s_cur).astype(out_ref.dtype)
        for r in range(1, num_radial):                # static unroll, R is small
            s_next = two_c * s_cur - s_prev
            s_prev, s_cur = s_cur, s_next
            out_ref[pl.ds(r, 1), :] = (env * s_cur).astype(out_ref.dtype)
    else:
        freq = freq_ref[...]                          # (R, 1)
        # Broadcast (R,1) * (1,TE) -> (R,TE); full 128-lane dense store.
        out_ref[...] = (env * jnp.sin(freq * x)).astype(out_ref.dtype)


def bessel_basis_layer_t(dist, freq, *, cutoff=5.0, envelope_exponent=5,
                         tile_e=65536, out_dtype=jnp.float32,
                         use_chebyshev_sin=False):
    """Optimized entry point.

    dist: (E,) f32, freq: (num_radial,) f32 -> (num_radial, E) lane-dense.
    Fuse the downstream Linear as `W.T @ out_t` instead of materializing (E, R).
    """
    E = dist.shape[0]
    R = freq.shape[0]
    p = envelope_exponent + 1
    LANE = 128

    # --- choose a lane-dense tile ---------------------------------------------
    # VMEM working set ~ 8*(R+1)*te bytes (double-buffered in + out blocks);
    # cap at ~24 MiB so it fits v7x's scoped VMEM with headroom.
    te_cap = max(LANE, ((24 << 20) // (8 * (R + 1)) // LANE) * LANE)

    e_pad = pl.cdiv(E, LANE) * LANE
    te = min(int(tile_e), e_pad, te_cap)
    te = max(LANE, (te // LANE) * LANE)
    # v7x has 2 TensorCores: aim for >= 4 grid steps when E is large enough so
    # the "parallel" axis shards across both cores and the pipeline stays warm.
    if e_pad >= 4 * LANE and pl.cdiv(e_pad, te) < 4:
        te = max(LANE, pl.cdiv(e_pad, 4 * LANE) * LANE)
    e_pad = pl.cdiv(e_pad, te) * te

    # Pad with dist == cutoff (x == 1): envelope mask zeroes it, 1/x stays finite.
    if e_pad != E:
        dist = jnp.concatenate(
            [dist, jnp.full((e_pad - E,), cutoff, dtype=dist.dtype)])

    dist2d = dist.reshape(1, e_pad).astype(jnp.float32)   # edges on lanes
    freq2d = freq.reshape(R, 1).astype(jnp.float32)       # radial on sublanes

    kernel = partial(_bessel_kernel, inv_cutoff=1.0 / float(cutoff), p=p,
                     num_radial=R, use_chebyshev=bool(use_chebyshev_sin))

    out_t = pl.pallas_call(
        kernel,
        out_shape=jax.ShapeDtypeStruct((R, e_pad), out_dtype),
        grid_spec=pltpu.PrefetchScalarGridSpec(
            num_scalar_prefetch=0,
            grid=(e_pad // te,),
            in_specs=[
                pl.BlockSpec((1, te), lambda i: (0, i)),   # dist row block
                pl.BlockSpec((R, 1), lambda i: (0, 0)),    # freq, grid-invariant
            ],
            out_specs=pl.BlockSpec((R, te), lambda i: (0, i)),
        ),
        compiler_params=pltpu.CompilerParams(
            dimension_semantics=("parallel",)),
        cost_estimate=pl.CostEstimate(
            flops=int(E) * (2 * R + 16),
            transcendentals=int(E) * (2 if use_chebyshev_sin else R),
            bytes_accessed=(R + 1) * int(E) * 4),
    )(dist2d, freq2d)

    # Drop the padded edges (no-op when E is already a multiple of the tile).
    return out_t[:, :E] if e_pad != E else out_t


def bessel_basis_layer(dist, freq, **kwargs):
    """PyTorch-interface wrapper: (E,) -> (E, num_radial).

    Prefer `bessel_basis_layer_t` and fuse the transpose into the consumer
    matmul; this wrapper exists only for drop-in parity with the nn.Module.
    """
    return bessel_basis_layer_t(dist, freq, **kwargs).T


def bessel_basis_ref(dist, freq, *, cutoff=5.0, envelope_exponent=5):
    """Pure-JAX reference mirroring the PyTorch module."""
    p = envelope_exponent + 1
    a = -(p + 1) * (p + 2) / 2.0
    b = float(p * (p + 2))
    c = -p * (p + 1) / 2.0
    x = dist[:, None] / cutoff
    x0 = x ** (p - 1)
    x1 = x0 * x
    x2 = x1 * x
    env = (1.0 / x + a * x0 + b * x1 + c * x2) * (x < 1.0).astype(x.dtype)
    return env * jnp.sin(freq[None, :] * x)


if __name__ == "__main__":
    num_radial = 8
    cutoff = 5.0
    envelope_exponent = 5

    # Deterministic parameter init (matches reset_parameters): freq = [1..R] * pi
    freq = jnp.arange(1, num_radial + 1, dtype=jnp.float32) * math.pi

    key = jax.random.PRNGKey(0)

    # --- small, 128-aligned case (single grid step) ---------------------------
    E0 = 256
    dist0 = jax.random.uniform(key, (E0,), dtype=jnp.float32,
                               minval=0.1, maxval=cutoff * 1.2)
    out0 = jax.block_until_ready(
        bessel_basis_layer(dist0, freq, cutoff=cutoff,
                           envelope_exponent=envelope_exponent))
    ref0 = bessel_basis_ref(dist0, freq, cutoff=cutoff,
                            envelope_exponent=envelope_exponent)
    assert out0.shape == (E0, num_radial)
    assert jnp.allclose(out0, ref0, atol=1e-5, rtol=1e-5), "mismatch (E=256)"

    # --- unaligned case exercising padding + multi-step grid ------------------
    E1 = 1000
    dist1 = jax.random.uniform(jax.random.PRNGKey(1), (E1,), dtype=jnp.float32,
                               minval=0.1, maxval=cutoff * 1.2)
    out1_t = jax.block_until_ready(
        bessel_basis_layer_t(dist1, freq, cutoff=cutoff,
                             envelope_exponent=envelope_exponent))
    ref1 = bessel_basis_ref(dist1, freq, cutoff=cutoff,
                            envelope_exponent=envelope_exponent)
    assert out1_t.shape == (num_radial, E1)
    assert jnp.allclose(out1_t.T, ref1, atol=1e-5, rtol=1e-5), "mismatch (E=1000)"

    # --- Chebyshev-recurrence path (valid while freq = n*pi, i.e. at init) ----
    out1_cheb = jax.block_until_ready(
        bessel_basis_layer_t(dist1, freq, cutoff=cutoff,
                             envelope_exponent=envelope_exponent,
                             use_chebyshev_sin=True))
    assert jnp.allclose(out1_cheb.T, ref1, atol=1e-4, rtol=1e-4), "mismatch (cheb)"

    print("KERNEL_OK")
</pallas_src>

<mosaic_0001>
module attributes {stable_mosaic.version = 11 : i64} {
  func.func @_bessel_kernel(%arg0: i32, %arg1: memref<1x256xf32, #tpu.memory_space<vmem>>, %arg2: memref<8x1xf32, #tpu.memory_space<vmem>>, %arg3: memref<8x256xf32, #tpu.memory_space<vmem>>) attributes {dimension_semantics = [#tpu.dimension_semantics<parallel>], iteration_bounds = array<i64: 1>, scalar_prefetch = 0 : i64, scratch_operands = 0 : i64, tpu.core_type = #tpu.core_type<tc>, window_params = [{transform_indices = @transform_0, window_bounds = array<i64: 1, 256>}, {pipeline_mode = #tpu.pipeline_mode<synchronous>, transform_indices = @transform_1, window_bounds = array<i64: 8, 1>}, {transform_indices = @transform_2, window_bounds = array<i64: 8, 256>}]} {
    %c0 = arith.constant 0 : index
    %c0_0 = arith.constant 0 : index
    %0 = vector.load %arg1[%c0, %c0_0] : memref<1x256xf32, #tpu.memory_space<vmem>>, vector<1x256xf32>
    %cst = arith.constant 2.000000e-01 : f32
    %1 = vector.broadcast %cst : f32 to vector<1x256xf32>
    %2 = arith.mulf %0, %1 : vector<1x256xf32>
    %3 = arith.mulf %2, %2 : vector<1x256xf32>
    %4 = arith.mulf %3, %3 : vector<1x256xf32>
    %5 = arith.mulf %2, %4 : vector<1x256xf32>
    %6 = arith.mulf %5, %2 : vector<1x256xf32>
    %7 = arith.mulf %6, %2 : vector<1x256xf32>
    %cst_1 = arith.constant 1.000000e+00 : f32
    %8 = vector.broadcast %cst_1 : f32 to vector<1x256xf32>
    %9 = arith.divf %8, %2 : vector<1x256xf32>
    %cst_2 = arith.constant -2.800000e+01 : f32
    %10 = vector.broadcast %cst_2 : f32 to vector<1x256xf32>
    %11 = arith.mulf %10, %5 : vector<1x256xf32>
    %12 = arith.addf %9, %11 : vector<1x256xf32>
    %cst_3 = arith.constant 4.800000e+01 : f32
    %13 = vector.broadcast %cst_3 : f32 to vector<1x256xf32>
    %14 = arith.mulf %13, %6 : vector<1x256xf32>
    %15 = arith.addf %12, %14 : vector<1x256xf32>
    %cst_4 = arith.constant -2.100000e+01 : f32
    %16 = vector.broadcast %cst_4 : f32 to vector<1x256xf32>
    %17 = arith.mulf %16, %7 : vector<1x256xf32>
    %18 = arith.addf %15, %17 : vector<1x256xf32>
    %cst_5 = arith.constant 1.000000e+00 : f32
    %19 = vector.broadcast %cst_5 : f32 to vector<1x256xf32>
    %20 = arith.cmpf olt, %2, %19 : vector<1x256xf32>
    %cst_6 = arith.constant 0.000000e+00 : f32
    %21 = vector.broadcast %cst_6 : f32 to vector<1x256xf32>
    %22 = arith.select %20, %18, %21 : vector<1x256xi1>, vector<1x256xf32>
    %c0_7 = arith.constant 0 : index
    %c0_8 = arith.constant 0 : index
    %23 = vector.load %arg2[%c0_7, %c0_8] : memref<8x1xf32, #tpu.memory_space<vmem>>, vector<8x1xf32>
    %24 = vector.broadcast %23 : vector<8x1xf32> to vector<8x256xf32>
    %25 = vector.broadcast %2 : vector<1x256xf32> to vector<8x256xf32>
    %26 = arith.mulf %24, %25 : vector<8x256xf32>
    %27 = math.sin %26 : vector<8x256xf32>
    %28 = vector.broadcast %22 : vector<1x256xf32> to vector<8x256xf32>
    %29 = arith.mulf %28, %27 : vector<8x256xf32>
    %c0_9 = arith.constant 0 : index
    %c0_10 = arith.constant 0 : index
    %30 = vector.load %arg3[%c0_9, %c0_10] : memref<8x256xf32, #tpu.memory_space<vmem>>, vector<8x256xf32>
    tpu.vector_store %arg3[%c0_9, %c0_10], %29 {strides = array<i32>} : memref<8x256xf32, #tpu.memory_space<vmem>>, vector<8x256xf32>,
    return
  }
  func.func @transform_0(%arg0: i32) -> (i32, i32) {
    %c0_i32 = arith.constant 0 : i32
    %c0_i32_0 = arith.constant 0 : i32
    return %c0_i32, %arg0 : i32, i32
  }
  func.func @transform_1(%arg0: i32) -> (i32, i32) {
    %c0_i32 = arith.constant 0 : i32
    %c0_i32_0 = arith.constant 0 : i32
    %c0_i32_1 = arith.constant 0 : i32
    return %c0_i32, %c0_i32_0 : i32, i32
  }
  func.func @transform_2(%arg0: i32) -> (i32, i32) {
    %c0_i32 = arith.constant 0 : i32
    %c0_i32_0 = arith.constant 0 : i32
    return %c0_i32, %arg0 : i32, i32
  }
}

</mosaic_0001>

<llo_original>
// kernel: tpu_custom_call.1
$region0: #{tpu_custom_call.1}
  #allocation0 [shape = 'u32[]', space=smem, size = 0x4, offset = 0x4, fixed_abs, tag = 'smem constant byte address 0x4 - core index']
  #allocation1 [shape = 'u32[144,128]{1,0:T(1,128)}', space=vmem, size = 0x12000, scoped, tag = 'internal scratch']
  %s0 = inlined_call_operand.vmem [shape: f32[1,256], index: 0, kind: input, shape index: {}]
  %s1 = inlined_call_operand.vmem [shape: f32[8,1], index: 1, kind: input, shape index: {}]
  %s2 = inlined_call_operand.hbm [shape: f32[8,256], index: 2, kind: output, shape index: {}]
  %s3 = sld [smem:[#allocation0]]
  $region18: #{tpu_custom_call.1} parent=0
    _
  %s5 = ssub.s32 1, %s3
  %s6 = scalar_select 0, %s5, %s3
  $region1: #{tpu_custom_call.1} parent=0
    #allocation2 [shape = 'u8[8192]{0}', space=vmem, size = 0x2000, scoped, tag = 'output window, operand 0, single buffered']
    #allocation3 [shape = 's32[1]{0}', space=sflag, size = 0x4, scoped, tag = 'scoped memory for tpu_custom_call.1']
    %7 = vsyncpa [#allocation3], 0
    // Predicated region
    $region2: #{tpu_custom_call.1} parent=1 // pred_check
      _
    $region3: #{tpu_custom_call.1} parent=1 // pred_check_branch
      %9 = sbr.rel (0) target = $region5
    $region4: #{tpu_custom_call.1} parent=1 // pred_region
      _
    $region5: #{tpu_custom_call.1} parent=1 // pred_fallthru
      _
    // Predicated region
    $region6: #{tpu_custom_call.1} parent=1 // pred_check
      _
    $region7: #{tpu_custom_call.1} parent=1 // pred_check_branch
      %11 = sbr.rel (0) target = $region9
    $region8: #{tpu_custom_call.1} parent=1 // pred_region
      _
    $region9: #{tpu_custom_call.1} parent=1 // pred_fallthru
      _
    %v12 = vld [vmem:[%s0] sm:$0x3]
    %v13 = vmul.f32 %v12, 0.2
    %v14 = vmul.f32 %v13, %v13
    %v15 = vmul.f32 %v14, %v14
    %v16 = vmul.f32 %v13, %v15
    %v17 = vmul.f32 %v16, %v13
    %v18 = vmul.f32 %v17, %v13
    %v19 = vrcp.pop %v13
    %v20 = vmul.f32 1.0, %v19
    %v21 = vmul.f32 %v16, -28.0
    %v22 = vadd.f32 %v20, %v21
    %v23 = vmul.f32 %v17, 48.0
    %v24 = vadd.f32 %v22, %v23
    %v25 = vmul.f32 %v18, -21.0
    %v26 = vadd.f32 %v24, %v25
    %vm27 = vcmp.lt.f32.partialorder %v13, 1.0
    %v28 = vsel %vm27, %v26, 0.0
    %v29 = vld [vmem:[%s1] sm:$0xff]
    %31 = vset.pattern.permute.xlu0 0
    %32 = vperm.xlu0 %31, %v29
    %v33 = vpop.permute.xlu0 %32
    %v36 = vlaneseq
    %v37 = vshrl.u32 %v36, 7
    %v38 = vsub.s32 0, %v37
    %v39 = vrot.slane %v13, %v38
    %v40 = vlaneseq
    %v41 = vshrl.u32 %v40, 7
    %v42 = vsub.s32 1, %v41
    %v43 = vrot.slane %v13, %v42
    %v46 = vmul.f32 %v33, %v39
    %v47 = vmul.f32 %v33, %v43
    %v48 = vand.u32 2147483647, %v46
    %vm49 = vcmp.le.f32.partialorder %v48, 0.7853982
    %vm50 = vcmp.lt.s32.totalorder %v46, 0
    %v51 = vand.u32 %v46, 2139095040
    %v52 = vshrl.u32 %v51, 23
    %v53 = vsub.s32 %v52, 127
    %v54 = vand.u32 2147483647, %v46
    %v55 = vand.u32 %v54, 8388607
    %v56 = vor.u32 %v55, 8388608
    %v57 = vsub.s32 0, %v56
    %v58 = vadd.s32 %v53, 1
    %vm59 = vcmp.gt.s32.totalorder %v58, 0
    %v60 = vsel %vm59, %v58, 0
    %v61 = vshrl.u32 %v60, 5
    %v62 = vand.u32 %v60, 31
    %v63 = vsub.s32 32, %v62
    %v64 = vshrl.u32 683565275, %v63
    %v65 = vshll.u32 683565275, %v62
    %v66 = vshrl.u32 2475754826, %v63
    %v67 = vor.u32 %v65, %v66
    %v68 = vshll.u32 2475754826, %v62
    %v69 = vshrl.u32 2131351028, %v63
    %v70 = vor.u32 %v68, %v69
    %v71 = vshll.u32 2131351028, %v62
    %v72 = vshrl.u32 2102212464, %v63
    %v73 = vor.u32 %v71, %v72
    %v74 = vshll.u32 2102212464, %v62
    %v75 = vshrl.u32 920167782, %v63
    %v76 = vor.u32 %v74, %v75
    %v77 = vshll.u32 920167782, %v62
    %v78 = vshrl.u32 1326507024, %v63
    %v79 = vor.u32 %v77, %v78
    %vm80 = vcmp.lt.s32.totalorder %v61, 1
    %vm81 = vcmp.lt.s32.totalorder %v61, 2
    %vm82 = vcmp.lt.s32.totalorder %v61, 3
    %vm83 = vcmp.lt.s32.totalorder %v61, 4
    %v84 = vsel %vm80, %v64, %v67
    %v85 = vsel %vm83, %v73, 2102212464
    %v86 = vsel %vm82, %v70, %v85
    %v87 = vsel %vm81, %v84, %v86
    %v88 = vsel %vm80, %v67, %v70
    %v89 = vsel %vm83, %v76, 920167782
    %v90 = vsel %vm82, %v73, %v89
    %v91 = vsel %vm81, %v88, %v90
    %v92 = vsel %vm80, %v70, %v73
    %v93 = vsel %vm83, %v79, 1326507024
    %v94 = vsel %vm82, %v76, %v93
    %v95 = vsel %vm81, %v92, %v94
    %v96 = vshll.u32 %v56, 8
    %v97 = vmul.u32.u64.compose %v96, %v95
    %v98 = vextract.low.u32 %v97
    %v99 = vextract.high.u32 %v97
    %v100 = vmul.u32.u64.compose %v96, %v91
    %v101 = vextract.low.u32 %v100
    %v102 = vextract.high.u32 %v100
    %v103 = vmul.u32 %v96, %v87
    %v104 = vadd.s32 %v99, %v101
    %vm105 = vc.u32 %v99, %v101
    %v106 = vadd.s32 %v102, 1
    %v107 = vsel %vm105, %v106, %v102
    %v108 = vadd.s32 %v103, %v107
    %v109 = vadd.s32 %v108, 536870912
    %v110 = vshrl.u32 %v109, 30
    %v111 = vshll.u32 %v110, 30
    %v112 = vsub.s32 %v108, %v111
    %vm113 = vcmp.lt.s32.totalorder %v112, 0
    %v114 = vsub.s32 0, %v112
    %v115 = vsel %vm113, %v114, %v112
    %v116 = vclz %v115
    %v117 = vsub.s32 %v116, 2
    %vm118 = vcmp.gt.s32.totalorder 0, %v117
    %v119 = vsel %vm118, 0, %v117
    %v120 = vsub.s32 32, %v119
    %v121 = vshll.u32 %v112, %v119
    %v122 = vshrl.u32 %v104, %v120
    %v123 = vor.u32 %v121, %v122
    %v124 = vsub.s32 4294967266, %v119
    %v125 = vadd.s32 %v124, 127
    %v126 = vshll.u32 %v125, 23
    %v127 = vor.u32 4788187, %v126
    %v128 = vand.u32 2147483647, %v127
    %v130 = vcvt.s32.f32 %v123
    %v131 = vmul.f32 %v130, %v128
    %v132 = vxor.u32 %v131, 2147483648
    %v133 = vsel %vm50, %v132, %v131
    %v134 = vsub.s32 4, %v110
    %v135 = vsel %vm50, %v134, %v110
    %v136 = vsel %vm49, %v46, %v133
    %v137 = vsel %vm49, 0, %v135
    %v138 = vcosq.f32.pop %v136
    %v139 = vsinq.f32.pop %v136
    %vm140 = vweird.f32 %v46
    %v141 = vadd.s32 %v137, 3
    %v142 = vand.u32 %v141, 3
    %vm143 = vcmp.lt.s32.totalorder %v142, 2
    %vm144 = vcmp.eq.s32.totalorder %v142, 0
    %v145 = vxor.u32 %v139, 2147483648
    %v146 = vsel %vm144, %v138, %v145
    %vm147 = vcmp.eq.s32.totalorder %v142, 2
    %v148 = vxor.u32 %v138, 2147483648
    %v149 = vsel %vm147, %v148, %v139
    %v150 = vsel %vm143, %v146, %v149
    %v151 = vsel %vm140, nan, %v150
    %v152 = vand.u32 2147483647, %v47
    %vm153 = vcmp.le.f32.partialorder %v152, 0.7853982
    %vm154 = vcmp.lt.s32.totalorder %v47, 0
    %v155 = vand.u32 %v47, 2139095040
    %v156 = vshrl.u32 %v155, 23
    %v157 = vsub.s32 %v156, 127
    %v158 = vand.u32 2147483647, %v47
    %v159 = vand.u32 %v158, 8388607
    %v160 = vor.u32 %v159, 8388608
    %v161 = vsub.s32 0, %v160
    %v162 = vadd.s32 %v157, 1
    %vm163 = vcmp.gt.s32.totalorder %v162, 0
    %v164 = vsel %vm163, %v162, 0
    %v165 = vshrl.u32 %v164, 5
    %v166 = vand.u32 %v164, 31
    %v167 = vsub.s32 32, %v166
    %v168 = vshrl.u32 683565275, %v167
    %v169 = vshll.u32 683565275, %v166
    %v170 = vshrl.u32 2475754826, %v167
    %v171 = vor.u32 %v169, %v170
    %v172 = vshll.u32 2475754826, %v166
    %v173 = vshrl.u32 2131351028, %v167
    %v174 = vor.u32 %v172, %v173
    %v175 = vshll.u32 2131351028, %v166
    %v176 = vshrl.u32 2102212464, %v167
    %v177 = vor.u32 %v175, %v176
    %v178 = vshll.u32 2102212464, %v166
    %v179 = vshrl.u32 920167782, %v167
    %v180 = vor.u32 %v178, %v179
    %v181 = vshll.u32 920167782, %v166
    %v182 = vshrl.u32 1326507024, %v167
    %v183 = vor.u32 %v181, %v182
    %vm184 = vcmp.lt.s32.totalorder %v165, 1
    %vm185 = vcmp.lt.s32.totalorder %v165, 2
    %vm186 = vcmp.lt.s32.totalorder %v165, 3
    %vm187 = vcmp.lt.s32.totalorder %v165, 4
    %v188 = vsel %vm184, %v168, %v171
    %v189 = vsel %vm187, %v177, 2102212464
    %v190 = vsel %vm186, %v174, %v189
    %v191 = vsel %vm185, %v188, %v190
    %v192 = vsel %vm184, %v171, %v174
    %v193 = vsel %vm187, %v180, 920167782
    %v194 = vsel %vm186, %v177, %v193
    %v195 = vsel %vm185, %v192, %v194
    %v196 = vsel %vm184, %v174, %v177
    %v197 = vsel %vm187, %v183, 1326507024
    %v198 = vsel %vm186, %v180, %v197
    %v199 = vsel %vm185, %v196, %v198
    %v200 = vshll.u32 %v160, 8
    %v201 = vmul.u32.u64.compose %v200, %v199
    %v202 = vextract.low.u32 %v201
    %v203 = vextract.high.u32 %v201
    %v204 = vmul.u32.u64.compose %v200, %v195
    %v205 = vextract.low.u32 %v204
    %v206 = vextract.high.u32 %v204
    %v207 = vmul.u32 %v200, %v191
    %v208 = vadd.s32 %v203, %v205
    %vm209 = vc.u32 %v203, %v205
    %v210 = vadd.s32 %v206, 1
    %v211 = vsel %vm209, %v210, %v206
    %v212 = vadd.s32 %v207, %v211
    %v213 = vadd.s32 %v212, 536870912
    %v214 = vshrl.u32 %v213, 30
    %v215 = vshll.u32 %v214, 30
    %v216 = vsub.s32 %v212, %v215
    %vm217 = vcmp.lt.s32.totalorder %v216, 0
    %v218 = vsub.s32 0, %v216
    %v219 = vsel %vm217, %v218, %v216
    %v220 = vclz %v219
    %v221 = vsub.s32 %v220, 2
    %vm222 = vcmp.gt.s32.totalorder 0, %v221
    %v223 = vsel %vm222, 0, %v221
    %v224 = vsub.s32 32, %v223
    %v225 = vshll.u32 %v216, %v223
    %v226 = vshrl.u32 %v208, %v224
    %v227 = vor.u32 %v225, %v226
    %v228 = vsub.s32 4294967266, %v223
    %v229 = vadd.s32 %v228, 127
    %v230 = vshll.u32 %v229, 23
    %v231 = vor.u32 4788187, %v230
    %v232 = vand.u32 2147483647, %v231
    %v234 = vcvt.s32.f32 %v227
    %v235 = vmul.f32 %v234, %v232
    %v236 = vxor.u32 %v235, 2147483648
    %v237 = vsel %vm154, %v236, %v235
    %v238 = vsub.s32 4, %v214
    %v239 = vsel %vm154, %v238, %v214
    %v240 = vsel %vm153, %v47, %v237
    %v241 = vsel %vm153, 0, %v239
    %v242 = vcosq.f32.pop %v240
    %v243 = vsinq.f32.pop %v240
    %vm244 = vweird.f32 %v47
    %v245 = vadd.s32 %v241, 3
    %v246 = vand.u32 %v245, 3
    %vm247 = vcmp.lt.s32.totalorder %v246, 2
    %vm248 = vcmp.eq.s32.totalorder %v246, 0
    %v249 = vxor.u32 %v243, 2147483648
    %v250 = vsel %vm248, %v242, %v249
    %vm251 = vcmp.eq.s32.totalorder %v246, 2
    %v252 = vxor.u32 %v242, 2147483648
    %v253 = vsel %vm251, %v252, %v243
    %v254 = vsel %vm247, %v250, %v253
    %v255 = vsel %vm244, nan, %v254
    %v257 = vlaneseq
    %v258 = vshrl.u32 %v257, 7
    %v259 = vsub.s32 0, %v258
    %v260 = vrot.slane %v28, %v259
    %v261 = vlaneseq
    %v262 = vshrl.u32 %v261, 7
    %v263 = vsub.s32 1, %v262
    %v264 = vrot.slane %v28, %v263
    %v267 = vmul.f32 %v260, %v151
    %v268 = vmul.f32 %v264, %v255
    %269 = vst [vmem:[#allocation2] sm:$0xff] %v267
    %270 = vst [vmem:[#allocation2 + $0x8] sm:$0xff] %v268
    // Predicated region
    $region10: #{tpu_custom_call.1} parent=1 // pred_check
      _
    $region11: #{tpu_custom_call.1} parent=1 // pred_check_branch
      %272 = sbr.rel (0) target = $region13
    $region12: #{tpu_custom_call.1} parent=1 // pred_region
      %s274 = ssub.s32 256, 256
      %275 = vsyncadd [#allocation3], %s274
      %s277 = sshll.u32 [#allocation2], 4
      %s278 = int_to_ptr.vmem [resolvable:$true] %s277
      %280 = dma.vmem_to_hbm [thread:$0]  %s278, 256, %s2, [#allocation3]
    $region13: #{tpu_custom_call.1} parent=1 // pred_fallthru
      _
    // Predicated region
    $region14: #{tpu_custom_call.1} parent=1 // pred_check
      _
    $region15: #{tpu_custom_call.1} parent=1 // pred_check_branch
      %282 = sbr.rel (0) target = $region17
    $region16: #{tpu_custom_call.1} parent=1 // pred_region
      %283 = dma.done [#allocation3], 256
    $region17: #{tpu_custom_call.1} parent=1 // pred_fallthru
      _
    %284 = vsyncpa [#allocation3], 1

</llo_original>
